<compile_context>
chip_gen: v7x
topology: tpu7x:2x2x1
jax: 0.10.0
libtpu: 0.0.40
codegen_flags: <defaults>
</compile_context>

<pallas_src>
import jax
import jax.numpy as jnp
from jax.experimental import pallas as pl
from jax.experimental.pallas import tpu as pltpu


def _policy_kernel(x_ref, w1t_ref, b1_ref, w2t_ref, b2_ref, out_ref):
    # fc1 + ReLU:  x (TB, S) @ W1^T (S, Hp) -> h (TB, Hp)
    x = x_ref[...]
    h = jnp.dot(x, w1t_ref[...], preferred_element_type=jnp.float32) + b1_ref[...]
    h = jnp.maximum(h, 0.0)  # padded hidden lanes stay exactly 0

    # fc2:  h (TB, Hp) @ W2^T (Hp, Ap) -> logits (TB, Ap)
    logits = jnp.dot(h, w2t_ref[...], preferred_element_type=jnp.float32) + b2_ref[...]
    # Padded action lanes carry a -1e30 bias -> exp() underflows to 0 below.

    # Numerically-stable softmax over the action axis.
    m = jnp.max(logits, axis=1, keepdims=True)
    e = jnp.exp(logits - m)
    denom = jnp.sum(e, axis=1, keepdims=True)
    out_ref[...] = (e * pl.reciprocal(denom, approx=True)).astype(out_ref.dtype)


def _round_up(n, m):
    return ((n + m - 1) // m) * m


def policy_network_forward(x, w1, b1, w2, b2, *, tile_batch=512):
    """x: (B, num_states) f32 -> probs: (B, num_actions) f32.

    w1: (hidden, states), b1: (hidden,), w2: (actions, hidden), b2: (actions,)
    — the nn.Linear convention of the PyTorch module.
    """
    B, S = x.shape
    H = w1.shape[0]
    A = w2.shape[0]

    LANE, SUB = 128, 8
    h_pad = _round_up(max(H, LANE), LANE)
    a_pad = _round_up(max(A, LANE), LANE)

    # Batch tile: multiple of 8 sublanes, capped by tile_batch.
    tb = min(_round_up(tile_batch, SUB), _round_up(B, SUB))
    b_pad = _round_up(B, tb)

    # Wrapper-side transpose + zero-padding (one-time XLA ops).
    w1t = jnp.zeros((S, h_pad), jnp.float32).at[:, :H].set(w1.T.astype(jnp.float32))
    b1r = jnp.zeros((1, h_pad), jnp.float32).at[:, :H].set(b1.reshape(1, -1).astype(jnp.float32))
    w2t = jnp.zeros((h_pad, a_pad), jnp.float32).at[:H, :A].set(w2.T.astype(jnp.float32))
    # Padded action lanes get a huge negative bias so their softmax weight is 0.
    b2r = jnp.full((1, a_pad), -1e30, jnp.float32).at[:, :A].set(b2.reshape(1, -1).astype(jnp.float32))

    xp = jnp.zeros((b_pad, S), jnp.float32).at[:B, :].set(x.astype(jnp.float32))

    out = pl.pallas_call(
        _policy_kernel,
        out_shape=jax.ShapeDtypeStruct((b_pad, a_pad), jnp.float32),
        grid=(b_pad // tb,),
        in_specs=[
            pl.BlockSpec((tb, S), lambda i: (i, 0)),        # x: batch-tiled
            pl.BlockSpec((S, h_pad), lambda i: (0, 0)),     # W1^T: VMEM-resident
            pl.BlockSpec((1, h_pad), lambda i: (0, 0)),     # b1
            pl.BlockSpec((h_pad, a_pad), lambda i: (0, 0)),  # W2^T
            pl.BlockSpec((1, a_pad), lambda i: (0, 0)),     # b2 (padded lanes = -1e30)
        ],
        out_specs=pl.BlockSpec((tb, a_pad), lambda i: (i, 0)),
        compiler_params=pltpu.CompilerParams(
            dimension_semantics=("parallel",),
            vmem_limit_bytes=32 * 1024 * 1024,  # sized for v7x's smaller VMEM
        ),
    )(xp, w1t, b1r, w2t, b2r)

    return out[:B, :A]


def _reference_forward(x, w1, b1, w2, b2):
    h = jnp.maximum(x @ w1.T + b1, 0.0)
    logits = h @ w2.T + b2
    return jax.nn.softmax(logits, axis=1)


if __name__ == "__main__":
    # CartPole-like sizes: num_states=4, num_actions=2, hidden_size=32, batch=8.
    num_states, num_actions, hidden_size, batch = 4, 2, 32, 8

    key = jax.random.PRNGKey(0)
    k_x, k_w1, k_b1, k_w2, k_b2, k_x2 = jax.random.split(key, 6)

    # Deterministic parameter init (uniform, like PyTorch's default Linear init scale).
    bound1 = 1.0 / jnp.sqrt(num_states)
    bound2 = 1.0 / jnp.sqrt(hidden_size)
    w1 = jax.random.uniform(k_w1, (hidden_size, num_states), jnp.float32, -bound1, bound1)
    b1 = jax.random.uniform(k_b1, (hidden_size,), jnp.float32, -bound1, bound1)
    w2 = jax.random.uniform(k_w2, (num_actions, hidden_size), jnp.float32, -bound2, bound2)
    b2 = jax.random.uniform(k_b2, (num_actions,), jnp.float32, -bound2, bound2)

    # --- single-tile case (grid of 1) -------------------------------------
    x = jax.random.normal(k_x, (batch, num_states), jnp.float32)
    probs = jax.block_until_ready(policy_network_forward(x, w1, b1, w2, b2))
    expected = _reference_forward(x, w1, b1, w2, b2)

    assert probs.shape == (batch, num_actions)
    # approx reciprocal on the EUP has ~1e-3 relative error; irrelevant for sampling.
    assert jnp.allclose(jnp.sum(probs, axis=1), 1.0, atol=5e-3)
    assert jnp.allclose(probs, expected, atol=5e-3, rtol=5e-3)
    assert jnp.all(jnp.argmax(probs, axis=1) == jnp.argmax(expected, axis=1))

    # --- multi-tile case (exercises the batch grid + padding path) --------
    batch2 = 20  # not a multiple of the tile -> padded rows exercised too
    x2 = jax.random.normal(k_x2, (batch2, num_states), jnp.float32)
    probs2 = jax.block_until_ready(
        policy_network_forward(x2, w1, b1, w2, b2, tile_batch=8)
    )
    expected2 = _reference_forward(x2, w1, b1, w2, b2)
    assert probs2.shape == (batch2, num_actions)
    assert jnp.allclose(probs2, expected2, atol=5e-3, rtol=5e-3)

    print("KERNEL_OK")
</pallas_src>

<mosaic_0001>
module attributes {stable_mosaic.version = 11 : i64} {
  func.func @_policy_kernel(%arg0: i32, %arg1: memref<8x4xf32, #tpu.memory_space<vmem>>, %arg2: memref<4x128xf32, #tpu.memory_space<vmem>>, %arg3: memref<1x128xf32, #tpu.memory_space<vmem>>, %arg4: memref<128x128xf32, #tpu.memory_space<vmem>>, %arg5: memref<1x128xf32, #tpu.memory_space<vmem>>, %arg6: memref<8x128xf32, #tpu.memory_space<vmem>>) attributes {dimension_semantics = [#tpu.dimension_semantics<parallel>], iteration_bounds = array<i64: 1>, scalar_prefetch = 0 : i64, scratch_operands = 0 : i64, tpu.core_type = #tpu.core_type<tc>, window_params = [{transform_indices = @transform_0, window_bounds = array<i64: 8, 4>}, {pipeline_mode = #tpu.pipeline_mode<synchronous>, transform_indices = @transform_1, window_bounds = array<i64: 4, 128>}, {pipeline_mode = #tpu.pipeline_mode<synchronous>, transform_indices = @transform_2, window_bounds = array<i64: 1, 128>}, {pipeline_mode = #tpu.pipeline_mode<synchronous>, transform_indices = @transform_3, window_bounds = array<i64: 128, 128>}, {pipeline_mode = #tpu.pipeline_mode<synchronous>, transform_indices = @transform_4, window_bounds = array<i64: 1, 128>}, {transform_indices = @transform_5, window_bounds = array<i64: 8, 128>}]} {
    %c0 = arith.constant 0 : index
    %c0_0 = arith.constant 0 : index
    %0 = vector.load %arg1[%c0, %c0_0] : memref<8x4xf32, #tpu.memory_space<vmem>>, vector<8x4xf32>
    %c0_1 = arith.constant 0 : index
    %c0_2 = arith.constant 0 : index
    %1 = vector.load %arg2[%c0_1, %c0_2] : memref<4x128xf32, #tpu.memory_space<vmem>>, vector<4x128xf32>
    %cst = arith.constant dense<0.000000e+00> : vector<8x128xf32>
    %2 = tpu.matmul %0, %1, %cst {dimension_numbers = #tpu.dot_dimension_numbers<[1], [0], [0], [1], [0, 0, 1, 1], [], []>} : vector<8x4xf32>, vector<4x128xf32>, vector<8x128xf32> -> vector<8x128xf32>
    %c0_3 = arith.constant 0 : index
    %c0_4 = arith.constant 0 : index
    %3 = vector.load %arg3[%c0_3, %c0_4] : memref<1x128xf32, #tpu.memory_space<vmem>>, vector<1x128xf32>
    %4 = vector.broadcast %3 : vector<1x128xf32> to vector<8x128xf32>
    %5 = arith.addf %2, %4 : vector<8x128xf32>
    %cst_5 = arith.constant 0.000000e+00 : f32
    %6 = vector.broadcast %cst_5 : f32 to vector<8x128xf32>
    %7 = arith.maximumf %5, %6 : vector<8x128xf32>
    %c0_6 = arith.constant 0 : index
    %c0_7 = arith.constant 0 : index
    %8 = vector.load %arg4[%c0_6, %c0_7] : memref<128x128xf32, #tpu.memory_space<vmem>>, vector<128x128xf32>
    %cst_8 = arith.constant dense<0.000000e+00> : vector<8x128xf32>
    %9 = tpu.matmul %7, %8, %cst_8 {dimension_numbers = #tpu.dot_dimension_numbers<[1], [0], [0], [1], [0, 0, 1, 1], [], []>} : vector<8x128xf32>, vector<128x128xf32>, vector<8x128xf32> -> vector<8x128xf32>
    %c0_9 = arith.constant 0 : index
    %c0_10 = arith.constant 0 : index
    %10 = vector.load %arg5[%c0_9, %c0_10] : memref<1x128xf32, #tpu.memory_space<vmem>>, vector<1x128xf32>
    %11 = vector.broadcast %10 : vector<1x128xf32> to vector<8x128xf32>
    %12 = arith.addf %9, %11 : vector<8x128xf32>
    %cst_11 = arith.constant dense<0xFF800000> : vector<8xf32>
    %13 = vector.multi_reduction <maximumf>, %12, %cst_11 [1] : vector<8x128xf32> to vector<8xf32>
    %14 = vector.shape_cast %13 : vector<8xf32> to vector<8x1xf32>
    %15 = vector.broadcast %14 : vector<8x1xf32> to vector<8x128xf32>
    %16 = arith.subf %12, %15 : vector<8x128xf32>
    %17 = math.exp %16 : vector<8x128xf32>
    %cst_12 = arith.constant dense<0.000000e+00> : vector<8xf32>
    %18 = vector.multi_reduction <add>, %17, %cst_12 [1] : vector<8x128xf32> to vector<8xf32>
    %19 = vector.shape_cast %18 : vector<8xf32> to vector<8x1xf32>
    %20 = tpu.reciprocal %19 {approx = true} : vector<8x1xf32> -> vector<8x1xf32>
    %21 = vector.broadcast %20 : vector<8x1xf32> to vector<8x128xf32>
    %22 = arith.mulf %17, %21 : vector<8x128xf32>
    %c0_13 = arith.constant 0 : index
    %c0_14 = arith.constant 0 : index
    %23 = vector.load %arg6[%c0_13, %c0_14] : memref<8x128xf32, #tpu.memory_space<vmem>>, vector<8x128xf32>
    tpu.vector_store %arg6[%c0_13, %c0_14], %22 {strides = array<i32>} : memref<8x128xf32, #tpu.memory_space<vmem>>, vector<8x128xf32>,
    return
  }
  func.func @transform_0(%arg0: i32) -> (i32, i32) {
    %c0_i32 = arith.constant 0 : i32
    %c0_i32_0 = arith.constant 0 : i32
    return %arg0, %c0_i32 : i32, i32
  }
  func.func @transform_1(%arg0: i32) -> (i32, i32) {
    %c0_i32 = arith.constant 0 : i32
    %c0_i32_0 = arith.constant 0 : i32
    %c0_i32_1 = arith.constant 0 : i32
    return %c0_i32, %c0_i32_0 : i32, i32
  }
  func.func @transform_2(%arg0: i32) -> (i32, i32) {
    %c0_i32 = arith.constant 0 : i32
    %c0_i32_0 = arith.constant 0 : i32
    %c0_i32_1 = arith.constant 0 : i32
    return %c0_i32, %c0_i32_0 : i32, i32
  }
  func.func @transform_3(%arg0: i32) -> (i32, i32) {
    %c0_i32 = arith.constant 0 : i32
    %c0_i32_0 = arith.constant 0 : i32
    %c0_i32_1 = arith.constant 0 : i32
    return %c0_i32, %c0_i32_0 : i32, i32
  }
  func.func @transform_4(%arg0: i32) -> (i32, i32) {
    %c0_i32 = arith.constant 0 : i32
    %c0_i32_0 = arith.constant 0 : i32
    %c0_i32_1 = arith.constant 0 : i32
    return %c0_i32, %c0_i32_0 : i32, i32
  }
  func.func @transform_5(%arg0: i32) -> (i32, i32) {
    %c0_i32 = arith.constant 0 : i32
    %c0_i32_0 = arith.constant 0 : i32
    return %arg0, %c0_i32 : i32, i32
  }
}

</mosaic_0001>

<llo_original>
// kernel: tpu_custom_call.1
$region0: #{tpu_custom_call.1}
  #allocation0 [shape = 'u32[]', space=smem, size = 0x4, offset = 0x4, fixed_abs, tag = 'smem constant byte address 0x4 - core index']
  #allocation1 [shape = 'u32[144,128]{1,0:T(1,128)}', space=vmem, size = 0x12000, scoped, tag = 'internal scratch']
  %s0 = inlined_call_operand.vmem [shape: f32[8,4], index: 0, kind: input, shape index: {}]
  %s1 = inlined_call_operand.vmem [shape: f32[4,128], index: 1, kind: input, shape index: {}]
  %s2 = inlined_call_operand.vmem [shape: f32[1,128], index: 2, kind: input, shape index: {}]
  %s3 = inlined_call_operand.hbm [shape: f32[128,128], index: 3, kind: input, shape index: {}]
  %s4 = inlined_call_operand.vmem [shape: f32[1,128], index: 4, kind: input, shape index: {}]
  %s5 = inlined_call_operand.hbm [shape: f32[8,128], index: 5, kind: output, shape index: {}]
  %s6 = sld [smem:[#allocation0]]
  $region34: #{tpu_custom_call.1} parent=0
    _
  %s8 = ssub.s32 1, %s6
  %s9 = scalar_select 0, %s8, %s6
  $region1: #{tpu_custom_call.1} parent=0
    #allocation2 [shape = 'u8[65536]{0}', space=vmem, size = 0x10000, scoped, tag = 'input window, operand 3, single buffered']
    #allocation3 [shape = 's32[1]{0}', space=sflag, size = 0x4, scoped, tag = 'scoped memory for tpu_custom_call.1']
    #allocation4 [shape = 's32[1]{0}', space=sflag, size = 0x4, scoped, tag = 'scoped memory for tpu_custom_call.1']
    #allocation5 [shape = 'u8[4096]{0}', space=vmem, size = 0x1000, scoped, tag = 'output window, operand 0, single buffered']
    %10 = vsyncpa [#allocation3], 0
    %11 = vsyncpa [#allocation4], 0
    // Predicated region
    $region2: #{tpu_custom_call.1} parent=1 // pred_check
      _
    $region3: #{tpu_custom_call.1} parent=1 // pred_check_branch
      %13 = sbr.rel (0) target = $region5
    $region4: #{tpu_custom_call.1} parent=1 // pred_region
      _
    $region5: #{tpu_custom_call.1} parent=1 // pred_fallthru
      _
    // Predicated region
    $region6: #{tpu_custom_call.1} parent=1 // pred_check
      _
    $region7: #{tpu_custom_call.1} parent=1 // pred_check_branch
      %15 = sbr.rel (0) target = $region9
    $region8: #{tpu_custom_call.1} parent=1 // pred_region
      _
    $region9: #{tpu_custom_call.1} parent=1 // pred_fallthru
      _
    // Predicated region
    $region10: #{tpu_custom_call.1} parent=1 // pred_check
      _
    $region11: #{tpu_custom_call.1} parent=1 // pred_check_branch
      %17 = sbr.rel (0) target = $region13
    $region12: #{tpu_custom_call.1} parent=1 // pred_region
      _
    $region13: #{tpu_custom_call.1} parent=1 // pred_fallthru
      _
    // Predicated region
    $region14: #{tpu_custom_call.1} parent=1 // pred_check
      _
    $region15: #{tpu_custom_call.1} parent=1 // pred_check_branch
      %19 = sbr.rel (0) target = $region17
    $region16: #{tpu_custom_call.1} parent=1 // pred_region
      %s21 = ssub.s32 2048, 2048
      %22 = vsyncadd [#allocation3], %s21
      %s23 = sshll.u32 [#allocation2], 4
      %s24 = int_to_ptr.vmem [resolvable:$true] %s23
      %29 = dma.hbm_to_vmem [thread:$0]  %s3, 2048, %s24, [#allocation3], 128, 128, 8
    $region17: #{tpu_custom_call.1} parent=1 // pred_fallthru
      _
    // Predicated region
    $region18: #{tpu_custom_call.1} parent=1 // pred_check
      _
    $region19: #{tpu_custom_call.1} parent=1 // pred_check_branch
      %31 = sbr.rel (0) target = $region21
    $region20: #{tpu_custom_call.1} parent=1 // pred_region
      _
    $region21: #{tpu_custom_call.1} parent=1 // pred_fallthru
      _
    // Predicated region
    $region22: #{tpu_custom_call.1} parent=1 // pred_check
      _
    $region23: #{tpu_custom_call.1} parent=1 // pred_check_branch
      %33 = sbr.rel (0) target = $region25
    $region24: #{tpu_custom_call.1} parent=1 // pred_region
      %34 = dma.done [#allocation3], 2048
    $region25: #{tpu_custom_call.1} parent=1 // pred_fallthru
      _
    %v35 = vld [vmem:[%s0] sm:$0xff]
    %v36 = vld [vmem:[%s1] sm:$0xf]
    %v37 = vld [vmem:[%s2] sm:$0x1]
    %v39 = vlaneseq
    %v40 = vshrl.u32 %v39, 7
    %v41 = vsub.s32 0, %v40
    %v42 = vrot.slane %v37, %v41
    %vm44 = vcmask 31744
    %v46 = vsel %vm44, %v35, 0
    %vm48 = vcmask 1043456
    %v50 = vsel %vm48, %v36, 0
    %52 = vmatprep.subr.mxu0 0.0
    %53 = vmatpush1.msra.mxu0 %v50
    %54 = vmatprep.subr.mxu0 0.0
    %55 = vmatpush1.msra.mxu0 0.0
    %56 = vmatprep.subr.mxu0 0.0
    %57 = vmatpush1.msra.mxu0 0.0
    %58 = vmatprep.subr.mxu0 0.0
    %59 = vmatpush1.msra.mxu0 0.0
    %60 = vmatprep.subr.mxu0 0.0
    %61 = vmatpush1.msra.mxu0 0.0
    %62 = vmatprep.subr.mxu0 0.0
    %63 = vmatpush1.msra.mxu0 0.0
    %64 = vmatprep.subr.mxu0 0.0
    %65 = vmatpush1.msra.mxu0 0.0
    %66 = vmatprep.subr.mxu0 0.0
    %67 = vmatpush1.msra.mxu0 0.0
    %68 = vmatprep.subr.mxu0 0.0
    %69 = vmatpush1.msra.mxu0 0.0
    %70 = vmatprep.subr.mxu0 0.0
    %71 = vmatpush1.msra.mxu0 0.0
    %72 = vmatprep.subr.mxu0 0.0
    %73 = vmatpush1.msra.mxu0 0.0
    %74 = vmatprep.subr.mxu0 0.0
    %75 = vmatpush1.msra.mxu0 0.0
    %76 = vmatprep.subr.mxu0 0.0
    %77 = vmatpush1.msra.mxu0 0.0
    %78 = vmatprep.subr.mxu0 0.0
    %79 = vmatpush1.msra.mxu0 0.0
    %80 = vmatprep.subr.mxu0 0.0
    %81 = vmatpush1.msra.mxu0 0.0
    %82 = vmatprep.subr.mxu0 0.0
    %83 = vmatpush1.msra.mxu0 0.0
    %84 = vmatprep.subr.mxu0 0.0
    %85 = vmatpush1.msra.mxu0 0.0
    %86 = vmatprep.subr.mxu0 0.0
    %87 = vmatpush1.msra.mxu0 0.0
    %88 = vmatprep.subr.mxu0 0.0
    %89 = vmatpush1.msra.mxu0 0.0
    %90 = vmatprep.subr.mxu0 0.0
    %91 = vmatpush1.msra.mxu0 0.0
    %92 = vmatprep.subr.mxu0 0.0
    %93 = vmatpush1.msra.mxu0 0.0
    %94 = vmatprep.subr.mxu0 0.0
    %95 = vmatpush1.msra.mxu0 0.0
    %96 = vmatprep.subr.mxu0 0.0
    %97 = vmatpush1.msra.mxu0 0.0
    %98 = vmatprep.subr.mxu0 0.0
    %99 = vmatpush1.msra.mxu0 0.0
    %100 = vmatprep.subr.mxu0 0.0
    %101 = vmatpush1.msra.mxu0 0.0
    %102 = vmatprep.subr.mxu0 0.0
    %103 = vmatpush1.msra.mxu0 0.0
    %104 = vmatprep.subr.mxu0 0.0
    %105 = vmatpush1.msra.mxu0 0.0
    %106 = vmatprep.subr.mxu0 0.0
    %107 = vmatpush1.msra.mxu0 0.0
    %108 = vmatprep.subr.mxu0 0.0
    %109 = vmatpush1.msra.mxu0 0.0
    %110 = vmatprep.subr.mxu0 0.0
    %111 = vmatpush1.msra.mxu0 0.0
    %112 = vmatprep.subr.mxu0 0.0
    %113 = vmatpush1.msra.mxu0 0.0
    %114 = vmatprep.subr.mxu0 0.0
    %115 = vmatpush1.msra.mxu0 0.0
    %116 = vmatprep.mubr.f32.mxu0 0.0
    %117 = vmatmul.mubr.f32.gmra.mrb[0].mxu0 %v46
    %v118 = vpop.f32.mrb[0].mxu0
    %v119 = vadd.f32 %v42, %v118
    %v120 = vpop.f32.mrb[0].mxu0
    %121 = vdwg.mxu0
    %v122 = vmax.f32 %v119, 0.0
    %v123 = vld [vmem:[#allocation2] sm:$0xff]
    %v124 = vld [vmem:[#allocation2 + $0x8] sm:$0xff]
    %v125 = vld [vmem:[#allocation2 + $0x10] sm:$0xff]
    %v126 = vld [vmem:[#allocation2 + $0x18] sm:$0xff]
    %v127 = vld [vmem:[#allocation2 + $0x20] sm:$0xff]
    %v128 = vld [vmem:[#allocation2 + $0x28] sm:$0xff]
    %v129 = vld [vmem:[#allocation2 + $0x30] sm:$0xff]
    %v130 = vld [vmem:[#allocation2 + $0x38] sm:$0xff]
    %v131 = vld [vmem:[#allocation2 + $0x40] sm:$0xff]
    %v132 = vld [vmem:[#allocation2 + $0x48] sm:$0xff]
    %v133 = vld [vmem:[#allocation2 + $0x50] sm:$0xff]
    %v134 = vld [vmem:[#allocation2 + $0x58] sm:$0xff]
    %v135 = vld [vmem:[#allocation2 + $0x60] sm:$0xff]
    %v136 = vld [vmem:[#allocation2 + $0x68] sm:$0xff]
    %v137 = vld [vmem:[#allocation2 + $0x70] sm:$0xff]
    %v138 = vld [vmem:[#allocation2 + $0x78] sm:$0xff]
    %v139 = vld [vmem:[%s4] sm:$0x1]
    %v141 = vlaneseq
    %v142 = vshrl.u32 %v141, 7
    %v143 = vsub.s32 0, %v142
    %v144 = vrot.slane %v139, %v143
    %146 = vmatprep.subr.mxu0 0.0
    %147 = vmatpush1.msra.mxu0 %v123
    %148 = vmatprep.subr.mxu0 0.0
    %149 = vmatpush1.msra.mxu0 %v124
    %150 = vmatprep.subr.mxu0 0.0
    %151 = vmatpush1.msra.mxu0 %v125
    %152 = vmatprep.subr.mxu0 0.0
    %153 = vmatpush1.msra.mxu0 %v126
    %154 = vmatprep.subr.mxu0 0.0
    %155 = vmatpush1.msra.mxu0 %v127
    %156 = vmatprep.subr.mxu0 0.0
    %157 = vmatpush1.msra.mxu0 %v128
    %158 = vmatprep.subr.mxu0 0.0
    %159 = vmatpush1.msra.mxu0 %v129
    %160 = vmatprep.subr.mxu0 0.0
    %161 = vmatpush1.msra.mxu0 %v130
    %162 = vmatprep.subr.mxu0 0.0
    %163 = vmatpush1.msra.mxu0 %v131
    %164 = vmatprep.subr.mxu0 0.0
    %165 = vmatpush1.msra.mxu0 %v132
    %166 = vmatprep.subr.mxu0 0.0
    %167 = vmatpush1.msra.mxu0 %v133
    %168 = vmatprep.subr.mxu0 0.0
    %169 = vmatpush1.msra.mxu0 %v134
    %170 = vmatprep.subr.mxu0 0.0
    %171 = vmatpush1.msra.mxu0 %v135
    %172 = vmatprep.subr.mxu0 0.0
    %173 = vmatpush1.msra.mxu0 %v136
    %174 = vmatprep.subr.mxu0 0.0
    %175 = vmatpush1.msra.mxu0 %v137
    %176 = vmatprep.subr.mxu0 0.0
    %177 = vmatpush1.msra.mxu0 %v138
    %178 = vmatprep.subr.mxu0 0.0
    %179 = vmatpush1.msra.mxu0 0.0
    %180 = vmatprep.subr.mxu0 0.0
    %181 = vmatpush1.msra.mxu0 0.0
    %182 = vmatprep.subr.mxu0 0.0
    %183 = vmatpush1.msra.mxu0 0.0
    %184 = vmatprep.subr.mxu0 0.0
    %185 = vmatpush1.msra.mxu0 0.0
    %186 = vmatprep.subr.mxu0 0.0
    %187 = vmatpush1.msra.mxu0 0.0
    %188 = vmatprep.subr.mxu0 0.0
    %189 = vmatpush1.msra.mxu0 0.0
    %190 = vmatprep.subr.mxu0 0.0
    %191 = vmatpush1.msra.mxu0 0.0
    %192 = vmatprep.subr.mxu0 0.0
    %193 = vmatpush1.msra.mxu0 0.0
    %194 = vmatprep.subr.mxu0 0.0
    %195 = vmatpush1.msra.mxu0 0.0
    %196 = vmatprep.subr.mxu0 0.0
    %197 = vmatpush1.msra.mxu0 0.0
    %198 = vmatprep.subr.mxu0 0.0
    %199 = vmatpush1.msra.mxu0 0.0
    %200 = vmatprep.subr.mxu0 0.0
    %201 = vmatpush1.msra.mxu0 0.0
    %202 = vmatprep.subr.mxu0 0.0
    %203 = vmatpush1.msra.mxu0 0.0
    %204 = vmatprep.subr.mxu0 0.0
    %205 = vmatpush1.msra.mxu0 0.0
    %206 = vmatprep.subr.mxu0 0.0
    %207 = vmatpush1.msra.mxu0 0.0
    %208 = vmatprep.subr.mxu0 0.0
    %209 = vmatpush1.msra.mxu0 0.0
    %210 = vmatprep.mubr.f32.mxu0 0.0
    %211 = vmatmul.mubr.f32.gmra.mrb[0].mxu0 %v122
    %v212 = vpop.f32.mrb[0].mxu0
    %v213 = vadd.f32 %v144, %v212
    %v214 = vpop.f32.mrb[0].mxu0
    %215 = vdwg.mxu0
    %216 = vmax.xlane.f32.xlu0 %v213
    %v217 = vpop.xlane.xlu0 %216
    %v218 = vsub.f32 %v213, %v217
    %v219 = vmul.f32 %v218, 1.442695
    %v220 = vpow.pop %v219
    %221 = vadd.xlane.f32.xlu0 %v220
    %v222 = vpop.xlane.xlu0 %221
    %v223 = vrcp.pop %v222
    %v224 = vmul.f32 %v220, %v223
    %225 = vst [vmem:[#allocation5] sm:$0xff] %v224
    // Predicated region
    $region26: #{tpu_custom_call.1} parent=1 // pred_check
      _
    $region27: #{tpu_custom_call.1} parent=1 // pred_check_branch
      %227 = sbr.rel (0) target = $region29
    $region28: #{tpu_custom_call.1} parent=1 // pred_region
      %s229 = ssub.s32 128, 128
      %230 = vsyncadd [#allocation4], %s229
      %s232 = sshll.u32 [#allocation5], 4
      %s233 = int_to_ptr.vmem [resolvable:$true] %s232
      %235 = dma.vmem_to_hbm [thread:$0]  %s233, 128, %s5, [#allocation4]
    $region29: #{tpu_custom_call.1} parent=1 // pred_fallthru
      _
    // Predicated region
    $region30: #{tpu_custom_call.1} parent=1 // pred_check
      _
    $region31: #{tpu_custom_call.1} parent=1 // pred_check_branch
      %237 = sbr.rel (0) target = $region33
    $region32: #{tpu_custom_call.1} parent=1 // pred_region
      %238 = dma.done [#allocation4], 128
    $region33: #{tpu_custom_call.1} parent=1 // pred_fallthru
      _
    %239 = vsyncpa [#allocation3], 1
    %240 = vsyncpa [#allocation4], 1

</llo_original>
